<compile_context>
chip_gen: v7x
topology: tpu7x:2x2x1
jax: 0.10.0
libtpu: 0.0.40
codegen_flags: <defaults>
</compile_context>

<pallas_src>
import functools

import jax
import jax.numpy as jnp
from jax.experimental import pallas as pl
from jax.experimental.pallas import tpu as pltpu


def _leaky_relu(x, slope):
    return jnp.where(x > 0, x, slope * x)


def identity_block_kernel(
    x_ref,                 # (1, C0, TM)  pixels-on-lanes input tile
    w1_ref, b1_ref,        # (C1, C0), (C1, 1)  -- BN scale pre-folded into W
    w2_ref, b2_ref,        # (C2, C1), (C2, 1)
    w3_ref, b3_ref,        # (C3, C2), (C3, 1)
    o_ref,                 # (1, C3, TM)
    *, negative_slope,
):
    x = x_ref[0].astype(jnp.float32)                       # (C0, TM)

    # conv1 (1x1) + folded BN + LeakyReLU
    h = jnp.dot(w1_ref[...], x, preferred_element_type=jnp.float32)
    h = _leaky_relu(h + b1_ref[...], negative_slope)

    # conv2 (1x1) + folded BN + LeakyReLU
    h = jnp.dot(w2_ref[...], h, preferred_element_type=jnp.float32)
    h = _leaky_relu(h + b2_ref[...], negative_slope)

    # conv3 (1x1) + folded BN (no activation)
    h = jnp.dot(w3_ref[...], h, preferred_element_type=jnp.float32)
    h = h + b3_ref[...]

    # residual add + output LeakyReLU
    out = _leaky_relu(h + x, negative_slope)
    o_ref[0] = out.astype(o_ref.dtype)


def identity_block_pallas(x_nchw, params, *, negative_slope=0.2, tile_m=512,
                          vmem_limit_bytes=None):
    """x_nchw: (N, C0, H, W).  params: dict of conv weights + BN scale/shift."""
    n, c0, h, w = x_nchw.shape
    hw = h * w

    # Fold BN (inference mode) scale into the conv weights; only bias remains.
    def fold(i):
        wt = params[f"w{i}"].astype(jnp.float32)            # (cout, cin)
        s = params[f"s{i}"].reshape(-1, 1).astype(jnp.float32)
        b = params[f"b{i}"].reshape(-1, 1).astype(jnp.float32)
        return s * wt, b

    w1, b1 = fold(1)
    w2, b2 = fold(2)
    w3, b3 = fold(3)
    c1, c2, c3 = w1.shape[0], w2.shape[0], w3.shape[0]
    assert c3 == c0, "residual add requires channels[0] == channels[3]"

    # NCHW -> (N, C, H*W) is a free reshape (H, W contiguous): no transpose.
    x3d = x_nchw.reshape(n, c0, hw)

    # Pick a lane-aligned pixel tile (multiple of 128, clamped to padded H*W)
    # and pad the pixel axis once so any N*H*W is supported with big tiles.
    tile = max(128, min(int(tile_m), pl.cdiv(hw, 128) * 128))
    tile = (tile // 128) * 128
    hw_pad = pl.cdiv(hw, tile) * tile
    if hw_pad != hw:
        x3d = jnp.pad(x3d, ((0, 0), (0, 0), (0, hw_pad - hw)))

    grid = (n, hw_pad // tile)
    invariant = lambda b, i: (0, 0)   # weights/biases resident across the grid

    kernel = functools.partial(identity_block_kernel,
                               negative_slope=negative_slope)

    out3d = pl.pallas_call(
        kernel,
        out_shape=jax.ShapeDtypeStruct((n, c3, hw_pad), x3d.dtype),
        grid_spec=pltpu.PrefetchScalarGridSpec(
            num_scalar_prefetch=0,
            grid=grid,
            in_specs=[
                pl.BlockSpec((1, c0, tile), lambda b, i: (b, 0, i)),
                pl.BlockSpec((c1, c0), invariant),
                pl.BlockSpec((c1, 1), invariant),
                pl.BlockSpec((c2, c1), invariant),
                pl.BlockSpec((c2, 1), invariant),
                pl.BlockSpec((c3, c2), invariant),
                pl.BlockSpec((c3, 1), invariant),
            ],
            out_specs=pl.BlockSpec((1, c3, tile), lambda b, i: (b, 0, i)),
        ),
        compiler_params=pltpu.CompilerParams(
            dimension_semantics=("parallel", "parallel"),
            vmem_limit_bytes=vmem_limit_bytes),
    )(x3d, w1, b1, w2, b2, w3, b3)

    if hw_pad != hw:
        out3d = out3d[:, :, :hw]
    return out3d.reshape(n, c3, h, w)


def make_params(key, channels, eps=1e-5):
    """Deterministic conv weights + BatchNorm params, with eval-mode BN
    expressed as per-channel scale/shift."""
    c0, c1, c2, c3 = channels
    dims = [(c1, c0), (c2, c1), (c3, c2)]
    keys = jax.random.split(key, 5 * len(dims))
    params = {}
    for idx, (cout, cin) in enumerate(dims, start=1):
        kw, kg, kb, km, kv = keys[5 * (idx - 1): 5 * idx]
        wt = jax.random.normal(kw, (cout, cin), jnp.float32) * 0.1
        gamma = 1.0 + 0.1 * jax.random.normal(kg, (cout,), jnp.float32)
        beta = 0.1 * jax.random.normal(kb, (cout,), jnp.float32)
        rmean = 0.1 * jax.random.normal(km, (cout,), jnp.float32)
        rvar = jnp.abs(jax.random.normal(kv, (cout,), jnp.float32)) + 0.5
        scale = gamma / jnp.sqrt(rvar + eps)
        shift = beta - rmean * scale
        params[f"w{idx}"] = wt          # (cout, cin) 1x1 conv weight
        params[f"s{idx}"] = scale       # (cout,) folded BN scale
        params[f"b{idx}"] = shift       # (cout,) folded BN shift
    return params


def identity_block_reference(x_nchw, params, negative_slope=0.2):
    """Pure-JAX reference replicating the PyTorch forward (eval-mode BN)."""
    n, c0, h, w = x_nchw.shape
    x2d = jnp.transpose(x_nchw, (0, 2, 3, 1)).reshape(-1, c0)

    def conv_bn(h_, w_, s_, b_):
        return jnp.dot(h_, w_.T) * s_[None, :] + b_[None, :]

    def lrelu(z):
        return jnp.where(z > 0, z, negative_slope * z)

    h1 = lrelu(conv_bn(x2d, params["w1"], params["s1"], params["b1"]))
    h2 = lrelu(conv_bn(h1, params["w2"], params["s2"], params["b2"]))
    h3 = conv_bn(h2, params["w3"], params["s3"], params["b3"])
    out = lrelu(h3 + x2d)
    c3 = params["w3"].shape[0]
    return jnp.transpose(out.reshape(n, h, w, c3), (0, 3, 1, 2))


if __name__ == "__main__":
    key = jax.random.PRNGKey(0)
    kx, kp = jax.random.split(key)

    channels = (4, 8, 8, 4)          # channels[0] == channels[3] for residual
    x = jax.random.normal(kx, (2, channels[0], 16, 16), jnp.float32)  # NCHW
    params = make_params(kp, channels)

    out = identity_block_pallas(x, params, negative_slope=0.2, tile_m=512)
    out = jax.block_until_ready(out)

    ref = identity_block_reference(x, params, negative_slope=0.2)
    assert out.shape == x.shape
    assert jnp.allclose(out, ref, atol=1e-5, rtol=1e-5), "mismatch vs reference"

    print("KERNEL_OK")
</pallas_src>

<mosaic_0001>
module attributes {stable_mosaic.version = 11 : i64} {
  func.func @identity_block_kernel(%arg0: i32, %arg1: i32, %arg2: memref<1x4x256xf32, #tpu.memory_space<vmem>>, %arg3: memref<8x4xf32, #tpu.memory_space<vmem>>, %arg4: memref<8x1xf32, #tpu.memory_space<vmem>>, %arg5: memref<8x8xf32, #tpu.memory_space<vmem>>, %arg6: memref<8x1xf32, #tpu.memory_space<vmem>>, %arg7: memref<4x8xf32, #tpu.memory_space<vmem>>, %arg8: memref<4x1xf32, #tpu.memory_space<vmem>>, %arg9: memref<1x4x256xf32, #tpu.memory_space<vmem>>) attributes {dimension_semantics = [#tpu.dimension_semantics<parallel>, #tpu.dimension_semantics<parallel>], iteration_bounds = array<i64: 2, 1>, scalar_prefetch = 0 : i64, scratch_operands = 0 : i64, tpu.core_type = #tpu.core_type<tc>, window_params = [{transform_indices = @transform_0, window_bounds = array<i64: 1, 4, 256>}, {pipeline_mode = #tpu.pipeline_mode<synchronous>, transform_indices = @transform_1, window_bounds = array<i64: 8, 4>}, {pipeline_mode = #tpu.pipeline_mode<synchronous>, transform_indices = @transform_2, window_bounds = array<i64: 8, 1>}, {pipeline_mode = #tpu.pipeline_mode<synchronous>, transform_indices = @transform_3, window_bounds = array<i64: 8, 8>}, {pipeline_mode = #tpu.pipeline_mode<synchronous>, transform_indices = @transform_4, window_bounds = array<i64: 8, 1>}, {pipeline_mode = #tpu.pipeline_mode<synchronous>, transform_indices = @transform_5, window_bounds = array<i64: 4, 8>}, {pipeline_mode = #tpu.pipeline_mode<synchronous>, transform_indices = @transform_6, window_bounds = array<i64: 4, 1>}, {transform_indices = @transform_7, window_bounds = array<i64: 1, 4, 256>}]} {
    %c0 = arith.constant 0 : index
    %c0_0 = arith.constant 0 : index
    %c0_1 = arith.constant 0 : index
    %0 = vector.load %arg2[%c0, %c0_0, %c0_1] : memref<1x4x256xf32, #tpu.memory_space<vmem>>, vector<1x4x256xf32>
    %1 = vector.shape_cast %0 : vector<1x4x256xf32> to vector<4x256xf32>
    %c0_2 = arith.constant 0 : index
    %c0_3 = arith.constant 0 : index
    %2 = vector.load %arg3[%c0_2, %c0_3] : memref<8x4xf32, #tpu.memory_space<vmem>>, vector<8x4xf32>
    %cst = arith.constant dense<0.000000e+00> : vector<8x256xf32>
    %3 = tpu.matmul %2, %1, %cst {dimension_numbers = #tpu.dot_dimension_numbers<[1], [0], [0], [1], [0, 0, 1, 1], [], []>} : vector<8x4xf32>, vector<4x256xf32>, vector<8x256xf32> -> vector<8x256xf32>
    %c0_4 = arith.constant 0 : index
    %c0_5 = arith.constant 0 : index
    %4 = vector.load %arg4[%c0_4, %c0_5] : memref<8x1xf32, #tpu.memory_space<vmem>>, vector<8x1xf32>
    %5 = vector.broadcast %4 : vector<8x1xf32> to vector<8x256xf32>
    %6 = arith.addf %3, %5 : vector<8x256xf32>
    %cst_6 = arith.constant 0.000000e+00 : f32
    %7 = vector.broadcast %cst_6 : f32 to vector<8x256xf32>
    %8 = arith.cmpf ogt, %6, %7 : vector<8x256xf32>
    %cst_7 = arith.constant 2.000000e-01 : f32
    %9 = vector.broadcast %cst_7 : f32 to vector<8x256xf32>
    %10 = arith.mulf %9, %6 : vector<8x256xf32>
    %11 = arith.select %8, %6, %10 : vector<8x256xi1>, vector<8x256xf32>
    %c0_8 = arith.constant 0 : index
    %c0_9 = arith.constant 0 : index
    %12 = vector.load %arg5[%c0_8, %c0_9] : memref<8x8xf32, #tpu.memory_space<vmem>>, vector<8x8xf32>
    %cst_10 = arith.constant dense<0.000000e+00> : vector<8x256xf32>
    %13 = tpu.matmul %12, %11, %cst_10 {dimension_numbers = #tpu.dot_dimension_numbers<[1], [0], [0], [1], [0, 0, 1, 1], [], []>} : vector<8x8xf32>, vector<8x256xf32>, vector<8x256xf32> -> vector<8x256xf32>
    %c0_11 = arith.constant 0 : index
    %c0_12 = arith.constant 0 : index
    %14 = vector.load %arg6[%c0_11, %c0_12] : memref<8x1xf32, #tpu.memory_space<vmem>>, vector<8x1xf32>
    %15 = vector.broadcast %14 : vector<8x1xf32> to vector<8x256xf32>
    %16 = arith.addf %13, %15 : vector<8x256xf32>
    %cst_13 = arith.constant 0.000000e+00 : f32
    %17 = vector.broadcast %cst_13 : f32 to vector<8x256xf32>
    %18 = arith.cmpf ogt, %16, %17 : vector<8x256xf32>
    %cst_14 = arith.constant 2.000000e-01 : f32
    %19 = vector.broadcast %cst_14 : f32 to vector<8x256xf32>
    %20 = arith.mulf %19, %16 : vector<8x256xf32>
    %21 = arith.select %18, %16, %20 : vector<8x256xi1>, vector<8x256xf32>
    %c0_15 = arith.constant 0 : index
    %c0_16 = arith.constant 0 : index
    %22 = vector.load %arg7[%c0_15, %c0_16] : memref<4x8xf32, #tpu.memory_space<vmem>>, vector<4x8xf32>
    %cst_17 = arith.constant dense<0.000000e+00> : vector<4x256xf32>
    %23 = tpu.matmul %22, %21, %cst_17 {dimension_numbers = #tpu.dot_dimension_numbers<[1], [0], [0], [1], [0, 0, 1, 1], [], []>} : vector<4x8xf32>, vector<8x256xf32>, vector<4x256xf32> -> vector<4x256xf32>
    %c0_18 = arith.constant 0 : index
    %c0_19 = arith.constant 0 : index
    %24 = vector.load %arg8[%c0_18, %c0_19] : memref<4x1xf32, #tpu.memory_space<vmem>>, vector<4x1xf32>
    %25 = vector.broadcast %24 : vector<4x1xf32> to vector<4x256xf32>
    %26 = arith.addf %23, %25 : vector<4x256xf32>
    %27 = arith.addf %26, %1 : vector<4x256xf32>
    %cst_20 = arith.constant 0.000000e+00 : f32
    %28 = vector.broadcast %cst_20 : f32 to vector<4x256xf32>
    %29 = arith.cmpf ogt, %27, %28 : vector<4x256xf32>
    %cst_21 = arith.constant 2.000000e-01 : f32
    %30 = vector.broadcast %cst_21 : f32 to vector<4x256xf32>
    %31 = arith.mulf %30, %27 : vector<4x256xf32>
    %32 = arith.select %29, %27, %31 : vector<4x256xi1>, vector<4x256xf32>
    %c0_22 = arith.constant 0 : index
    %c0_23 = arith.constant 0 : index
    %c0_24 = arith.constant 0 : index
    %33 = vector.load %arg9[%c0_22, %c0_23, %c0_24] : memref<1x4x256xf32, #tpu.memory_space<vmem>>, vector<1x4x256xf32>
    %34 = vector.shape_cast %33 : vector<1x4x256xf32> to vector<4x256xf32>
    %35 = vector.shape_cast %32 : vector<4x256xf32> to vector<1x4x256xf32>
    tpu.vector_store %arg9[%c0_22, %c0_23, %c0_24], %35 {strides = array<i32>} : memref<1x4x256xf32, #tpu.memory_space<vmem>>, vector<1x4x256xf32>,
    return
  }
  func.func @transform_0(%arg0: i32, %arg1: i32) -> (i32, i32, i32) {
    %c0_i32 = arith.constant 0 : i32
    %c0_i32_0 = arith.constant 0 : i32
    return %arg0, %c0_i32, %arg1 : i32, i32, i32
  }
  func.func @transform_1(%arg0: i32, %arg1: i32) -> (i32, i32) {
    %c0_i32 = arith.constant 0 : i32
    %c0_i32_0 = arith.constant 0 : i32
    %c0_i32_1 = arith.constant 0 : i32
    return %c0_i32, %c0_i32_0 : i32, i32
  }
  func.func @transform_2(%arg0: i32, %arg1: i32) -> (i32, i32) {
    %c0_i32 = arith.constant 0 : i32
    %c0_i32_0 = arith.constant 0 : i32
    %c0_i32_1 = arith.constant 0 : i32
    return %c0_i32, %c0_i32_0 : i32, i32
  }
  func.func @transform_3(%arg0: i32, %arg1: i32) -> (i32, i32) {
    %c0_i32 = arith.constant 0 : i32
    %c0_i32_0 = arith.constant 0 : i32
    %c0_i32_1 = arith.constant 0 : i32
    return %c0_i32, %c0_i32_0 : i32, i32
  }
  func.func @transform_4(%arg0: i32, %arg1: i32) -> (i32, i32) {
    %c0_i32 = arith.constant 0 : i32
    %c0_i32_0 = arith.constant 0 : i32
    %c0_i32_1 = arith.constant 0 : i32
    return %c0_i32, %c0_i32_0 : i32, i32
  }
  func.func @transform_5(%arg0: i32, %arg1: i32) -> (i32, i32) {
    %c0_i32 = arith.constant 0 : i32
    %c0_i32_0 = arith.constant 0 : i32
    %c0_i32_1 = arith.constant 0 : i32
    return %c0_i32, %c0_i32_0 : i32, i32
  }
  func.func @transform_6(%arg0: i32, %arg1: i32) -> (i32, i32) {
    %c0_i32 = arith.constant 0 : i32
    %c0_i32_0 = arith.constant 0 : i32
    %c0_i32_1 = arith.constant 0 : i32
    return %c0_i32, %c0_i32_0 : i32, i32
  }
  func.func @transform_7(%arg0: i32, %arg1: i32) -> (i32, i32, i32) {
    %c0_i32 = arith.constant 0 : i32
    %c0_i32_0 = arith.constant 0 : i32
    return %arg0, %c0_i32, %arg1 : i32, i32, i32
  }
}

</mosaic_0001>

<llo_original>
// kernel: tpu_custom_call.1
$region0: #{tpu_custom_call.1}
  #allocation0 [shape = 'u32[]', space=smem, size = 0x4, offset = 0x4, fixed_abs, tag = 'smem constant byte address 0x4 - core index']
  #allocation1 [shape = 'u32[144,128]{1,0:T(1,128)}', space=vmem, size = 0x12000, scoped, tag = 'internal scratch']
  %s0 = inlined_call_operand.vmem [shape: f32[2,4,256], index: 0, kind: input, shape index: {}]
  %s1 = inlined_call_operand.vmem [shape: f32[8,4], index: 1, kind: input, shape index: {}]
  %s2 = inlined_call_operand.vmem [shape: f32[8,1], index: 2, kind: input, shape index: {}]
  %s3 = inlined_call_operand.vmem [shape: f32[8,8], index: 3, kind: input, shape index: {}]
  %s4 = inlined_call_operand.vmem [shape: f32[8,1], index: 4, kind: input, shape index: {}]
  %s5 = inlined_call_operand.vmem [shape: f32[4,8], index: 5, kind: input, shape index: {}]
  %s6 = inlined_call_operand.vmem [shape: f32[4,1], index: 6, kind: input, shape index: {}]
  %s7 = inlined_call_operand.hbm [shape: f32[2,4,256], index: 7, kind: output, shape index: {}]
  %s8 = sld [smem:[#allocation0]]
  $region61: #{tpu_custom_call.1} parent=0
    _
  %s10 = ssub.s32 1, %s8
  %s11 = scalar_select 0, %s10, %s8
  $region1: #{tpu_custom_call.1} parent=0
    #allocation2 [shape = 'u8[8192]{0}', space=vmem, size = 0x2000, scoped, tag = 'output window, operand 0']
    #allocation3 [shape = 's32[2]{0}', space=sflag, size = 0x8, scoped, tag = 'scoped memory for tpu_custom_call.1']
    %12 = vsyncpa [#allocation3], 0
    %s13 = scalar_lea.sflag [#allocation3], 1
    %14 = vsyncpa %s13, 0
    loop: start=0, step=1, limit=4
    $region2: #{tpu_custom_call.1} parent=1 // loop_pre_header
      _
    $region3: #{tpu_custom_call.1} parent=1 // loop_header
      %s16 = sphi 0, %s20
      %p17 = scmp.ge.s32.totalorder %s16, 4
      %s23 = sphi 0, %s35
      %s24 = sphi 0, %s31
      %s25 = sphi 0, %s23
      %s26 = sphi 0, %s24
      %s27 = sphi 0, %s25
      %s28 = sphi 0, %s26
      %s40 = sphi 0, %s42
      %s43 = sphi 0, %s40
      %s44 = sphi 0, %s43
      %s60 = sphi 0, %s44
      %s64 = sphi 0, %s64
      %s66 = sphi 0, %s64
      %s67 = sphi 0, %s66
      %s81 = sphi 0, %s67
      %s85 = sphi 0, %s85
      %s87 = sphi 0, %s85
      %s88 = sphi 0, %s87
      %s102 = sphi 0, %s88
      %s106 = sphi 0, %s106
      %s108 = sphi 0, %s106
      %s109 = sphi 0, %s108
      %s123 = sphi 0, %s109
      %s127 = sphi 0, %s127
      %s129 = sphi 0, %s127
      %s130 = sphi 0, %s129
      %s144 = sphi 0, %s130
      %s148 = sphi 0, %s148
      %s150 = sphi 0, %s148
      %s151 = sphi 0, %s150
      %s165 = sphi 0, %s151
      %s169 = sphi 0, %s169
      %s171 = sphi 0, %s169
      %s172 = sphi 0, %s171
      %s186 = sphi 0, %s172
      %s194 = sphi 0, %s196
      %s197 = sphi 0, %s194
      %s198 = sphi 0, %s197
      %s214 = sphi 0, %s198
    $region4: #{tpu_custom_call.1} parent=1 // loop_header_branch
      %19 = sbr.rel (%p17) target = $region8
    $region5: #{tpu_custom_call.1} parent=1 // loop_body
      %s21 = ssub.s32 %s16, 1
      %s22 = ssub.s32 %s16, 2
      %s29 = sadd.s32 1, %s24
      %p30 = scmp.ge.s32.totalorder %s29, 1
      %s31 = scalar_select %p30, 0, %s29
      %s32 = sadd.s32 1, %s23
      %s33 = scalar_select %p30, %s32, %s23
      %p34 = scmp.ge.s32.totalorder %s33, 2
      %s35 = scalar_select %p34, 0, %s33
      %s36 = ssub.s32 %s23, %s35
      %s37 = ssub.s32 %s24, %s31
      %s38 = sor.u32 %s36, %s37
      %p39 = scmp.eq.s32.totalorder %s38, 0
      %s41 = sadd.s32 %s40, 1
      %s42 = scalar_select %p39, %s40, %s41
      %p45 = pneg %p39
      %p46 = scmp.eq.s32.totalorder %s16, 1
      %p47 = por %p45, %p46
      %p48 = scmp.ne.s32.totalorder %s40, %s43
      %p49 = scmp.eq.s32.totalorder %s16, 0
      %p50 = por %p48, %p49
      %p51 = scmp.ne.s32.totalorder %s40, %s43
      %p52 = scmp.eq.s32.totalorder %s21, 1
      %p53 = por %p51, %p52
      %p54 = scmp.ne.s32.totalorder %s43, %s44
      %p55 = scmp.eq.s32.totalorder %s21, 0
      %p56 = por %p54, %p55
      %p57 = scmp.ne.s32.totalorder %s43, %s44
      %p58 = scmp.eq.s32.totalorder %s22, 1
      %p59 = por %p57, %p58
      %p61 = scmp.ne.s32.totalorder %s44, %s60
      %p62 = scmp.eq.s32.totalorder %s22, 0
      %p63 = por %p61, %p62
      %s65 = sadd.s32 %s64, 1
      %p68 = scmp.eq.s32.totalorder %s16, 1
      %p69 = scmp.ne.s32.totalorder %s64, %s66
      %p70 = scmp.eq.s32.totalorder %s16, 0
      %p71 = por %p69, %p70
      %p72 = scmp.ne.s32.totalorder %s64, %s66
      %p73 = scmp.eq.s32.totalorder %s21, 1
      %p74 = por %p72, %p73
      %p75 = scmp.ne.s32.totalorder %s66, %s67
      %p76 = scmp.eq.s32.totalorder %s21, 0
      %p77 = por %p75, %p76
      %p78 = scmp.ne.s32.totalorder %s66, %s67
      %p79 = scmp.eq.s32.totalorder %s22, 1
      %p80 = por %p78, %p79
      %p82 = scmp.ne.s32.totalorder %s67, %s81
      %p83 = scmp.eq.s32.totalorder %s22, 0
      %p84 = por %p82, %p83
      %s86 = sadd.s32 %s85, 1
      %p89 = scmp.eq.s32.totalorder %s16, 1
      %p90 = scmp.ne.s32.totalorder %s85, %s87
      %p91 = scmp.eq.s32.totalorder %s16, 0
      %p92 = por %p90, %p91
      %p93 = scmp.ne.s32.totalorder %s85, %s87
      %p94 = scmp.eq.s32.totalorder %s21, 1
      %p95 = por %p93, %p94
      %p96 = scmp.ne.s32.totalorder %s87, %s88
      %p97 = scmp.eq.s32.totalorder %s21, 0
      %p98 = por %p96, %p97
      %p99 = scmp.ne.s32.totalorder %s87, %s88
      %p100 = scmp.eq.s32.totalorder %s22, 1
      %p101 = por %p99, %p100
      %p103 = scmp.ne.s32.totalorder %s88, %s102
      %p104 = scmp.eq.s32.totalorder %s22, 0
      %p105 = por %p103, %p104
      %s107 = sadd.s32 %s106, 1
      %p110 = scmp.eq.s32.totalorder %s16, 1
      %p111 = scmp.ne.s32.totalorder %s106, %s108
      %p112 = scmp.eq.s32.totalorder %s16, 0
      %p113 = por %p111, %p112
      %p114 = scmp.ne.s32.totalorder %s106, %s108
      %p115 = scmp.eq.s32.totalorder %s21, 1
      %p116 = por %p114, %p115
      %p117 = scmp.ne.s32.totalorder %s108, %s109
      %p118 = scmp.eq.s32.totalorder %s21, 0
      %p119 = por %p117, %p118
      %p120 = scmp.ne.s32.totalorder %s108, %s109
      %p121 = scmp.eq.s32.totalorder %s22, 1
      %p122 = por %p120, %p121
      %p124 = scmp.ne.s32.totalorder %s109, %s123
      %p125 = scmp.eq.s32.totalorder %s22, 0
      %p126 = por %p124, %p125
      %s128 = sadd.s32 %s127, 1
      %p131 = scmp.eq.s32.totalorder %s16, 1
      %p132 = scmp.ne.s32.totalorder %s127, %s129
      %p133 = scmp.eq.s32.totalorder %s16, 0
      %p134 = por %p132, %p133
      %p135 = scmp.ne.s32.totalorder %s127, %s129
      %p136 = scmp.eq.s32.totalorder %s21, 1
      %p137 = por %p135, %p136
      %p138 = scmp.ne.s32.totalorder %s129, %s130
      %p139 = scmp.eq.s32.totalorder %s21, 0
      %p140 = por %p138, %p139
      %p141 = scmp.ne.s32.totalorder %s129, %s130
      %p142 = scmp.eq.s32.totalorder %s22, 1
      %p143 = por %p141, %p142
      %p145 = scmp.ne.s32.totalorder %s130, %s144
      %p146 = scmp.eq.s32.totalorder %s22, 0
      %p147 = por %p145, %p146
      %s149 = sadd.s32 %s148, 1
      %p152 = scmp.eq.s32.totalorder %s16, 1
      %p153 = scmp.ne.s32.totalorder %s148, %s150
      %p154 = scmp.eq.s32.totalorder %s16, 0
      %p155 = por %p153, %p154
      %p156 = scmp.ne.s32.totalorder %s148, %s150
      %p157 = scmp.eq.s32.totalorder %s21, 1
      %p158 = por %p156, %p157
      %p159 = scmp.ne.s32.totalorder %s150, %s151
      %p160 = scmp.eq.s32.totalorder %s21, 0
      %p161 = por %p159, %p160
      %p162 = scmp.ne.s32.totalorder %s150, %s151
      %p163 = scmp.eq.s32.totalorder %s22, 1
      %p164 = por %p162, %p163
      %p166 = scmp.ne.s32.totalorder %s151, %s165
      %p167 = scmp.eq.s32.totalorder %s22, 0
      %p168 = por %p166, %p167
      %s170 = sadd.s32 %s169, 1
      %p173 = scmp.eq.s32.totalorder %s16, 1
      %p174 = scmp.ne.s32.totalorder %s169, %s171
      %p175 = scmp.eq.s32.totalorder %s16, 0
      %p176 = por %p174, %p175
      %p177 = scmp.ne.s32.totalorder %s169, %s171
      %p178 = scmp.eq.s32.totalorder %s21, 1
      %p179 = por %p177, %p178
      %p180 = scmp.ne.s32.totalorder %s171, %s172
      %p181 = scmp.eq.s32.totalorder %s21, 0
      %p182 = por %p180, %p181
      %p183 = scmp.ne.s32.totalorder %s171, %s172
      %p184 = scmp.eq.s32.totalorder %s22, 1
      %p185 = por %p183, %p184
      %p187 = scmp.ne.s32.totalorder %s172, %s186
      %p188 = scmp.eq.s32.totalorder %s22, 0
      %p189 = por %p187, %p188
      %s190 = ssub.s32 %s23, %s35
      %s191 = ssub.s32 %s24, %s31
      %s192 = sor.u32 %s190, %s191
      %p193 = scmp.eq.s32.totalorder %s192, 0
      %s195 = sadd.s32 %s194, 1
      %s196 = scalar_select %p193, %s194, %s195
      %p199 = pneg %p193
      %p200 = scmp.eq.s32.totalorder %s16, 1
      %p201 = por %p199, %p200
      %p202 = scmp.ne.s32.totalorder %s194, %s197
      %p203 = scmp.eq.s32.totalorder %s16, 0
      %p204 = por %p202, %p203
      %p205 = scmp.ne.s32.totalorder %s194, %s197
      %p206 = scmp.eq.s32.totalorder %s21, 1
      %p207 = por %p205, %p206
      %p208 = scmp.ne.s32.totalorder %s197, %s198
      %p209 = scmp.eq.s32.totalorder %s21, 0
      %p210 = por %p208, %p209
      %p211 = scmp.ne.s32.totalorder %s197, %s198
      %p212 = scmp.eq.s32.totalorder %s22, 1
      %p213 = por %p211, %p212
      %p215 = scmp.ne.s32.totalorder %s198, %s214
      %p216 = scmp.eq.s32.totalorder %s22, 0
      %p217 = por %p215, %p216
      %p218 = scmp.le.s32.totalorder 1, %s16
      %p219 = scmp.lt.s32.totalorder %s16, 3
      %p220 = pnand %p218, %p219
      %p221 = pneg %p220
      // Predicated region
      $region9: #{tpu_custom_call.1} parent=5 // pred_check
        _
      $region10: #{tpu_custom_call.1} parent=5 // pred_check_branch
        %223 = sbr.rel (%p220) target = $region12
      $region11: #{tpu_custom_call.1} parent=5 // pred_region
        %s224 = ssub.s32 %s16, 1
        // Predicated region
        $region13: #{tpu_custom_call.1} parent=11 // pred_check
          %p225 = pneg %p77
        $region14: #{tpu_custom_call.1} parent=11 // pred_check_branch
          %227 = sbr.rel (%p225) target = $region16
        $region15: #{tpu_custom_call.1} parent=11 // pred_region
          _
        $region16: #{tpu_custom_call.1} parent=11 // pred_fallthru
          _
        // Predicated region
        $region17: #{tpu_custom_call.1} parent=11 // pred_check
          %p228 = pneg %p98
        $region18: #{tpu_custom_call.1} parent=11 // pred_check_branch
          %230 = sbr.rel (%p228) target = $region20
        $region19: #{tpu_custom_call.1} parent=11 // pred_region
          _
        $region20: #{tpu_custom_call.1} parent=11 // pred_fallthru
          _
        // Predicated region
        $region21: #{tpu_custom_call.1} parent=11 // pred_check
          %p231 = pneg %p119
        $region22: #{tpu_custom_call.1} parent=11 // pred_check_branch
          %233 = sbr.rel (%p231) target = $region24
        $region23: #{tpu_custom_call.1} parent=11 // pred_region
          _
        $region24: #{tpu_custom_call.1} parent=11 // pred_fallthru
          _
        // Predicated region
        $region25: #{tpu_custom_call.1} parent=11 // pred_check
          %p234 = pneg %p140
        $region26: #{tpu_custom_call.1} parent=11 // pred_check_branch
          %236 = sbr.rel (%p234) target = $region28
        $region27: #{tpu_custom_call.1} parent=11 // pred_region
          _
        $region28: #{tpu_custom_call.1} parent=11 // pred_fallthru
          _
        // Predicated region
        $region29: #{tpu_custom_call.1} parent=11 // pred_check
          %p237 = pneg %p161
        $region30: #{tpu_custom_call.1} parent=11 // pred_check_branch
          %239 = sbr.rel (%p237) target = $region32
        $region31: #{tpu_custom_call.1} parent=11 // pred_region
          _
        $region32: #{tpu_custom_call.1} parent=11 // pred_fallthru
          _
        // Predicated region
        $region33: #{tpu_custom_call.1} parent=11 // pred_check
          %p240 = pneg %p182
        $region34: #{tpu_custom_call.1} parent=11 // pred_check_branch
          %242 = sbr.rel (%p240) target = $region36
        $region35: #{tpu_custom_call.1} parent=11 // pred_region
          _
        $region36: #{tpu_custom_call.1} parent=11 // pred_fallthru
          _
      $region12: #{tpu_custom_call.1} parent=5 // pred_fallthru
        _
      %p243 = scmp.lt.s32.totalorder %s16, 2
      // Predicated region
      $region37: #{tpu_custom_call.1} parent=5 // pred_check
        %p244 = pneg %p243
      $region38: #{tpu_custom_call.1} parent=5 // pred_check_branch
        %246 = sbr.rel (%p244) target = $region40
      $region39: #{tpu_custom_call.1} parent=5 // pred_region
        // Predicated region
        $region41: #{tpu_custom_call.1} parent=39 // pred_check
          %p247 = pneg %p50
        $region42: #{tpu_custom_call.1} parent=39 // pred_check_branch
          %249 = sbr.rel (%p247) target = $region44
        $region43: #{tpu_custom_call.1} parent=39 // pred_region
          %s250 = smul.u32 2, %s24
          %p251 = scmp.lt.s32.totalorder %s23, 1
          %s252 = scalar_select %p251, %s23, 1
          %p253 = scmp.lt.s32.totalorder %s250, 1
          %s254 = scalar_select %p253, %s250, 1
          %s255 = smul.addr %s252, 2
          %s256 = sadd.s32 %s254, %s255
          %s257 = smul.addr %s256, 4
          %s258 = scalar_lea.vmem %s0, %s257
          %s259 = smul.u32 2, %s24
        $region44: #{tpu_custom_call.1} parent=39 // pred_fallthru
          _
      $region40: #{tpu_custom_call.1} parent=5 // pred_fallthru
        _
      %p260 = scmp.le.s32.totalorder 1, %s16
      %p261 = scmp.lt.s32.totalorder %s16, 3
      %p262 = pnand %p260, %p261
      %p263 = pneg %p262
      // Predicated region
      $region45: #{tpu_custom_call.1} parent=5 // pred_check
        _
      $region46: #{tpu_custom_call.1} parent=5 // pred_check_branch
        %265 = sbr.rel (%p262) target = $region48
      $region47: #{tpu_custom_call.1} parent=5 // pred_region
        %s266 = ssub.s32 %s16, 1
        %s267 = smul.u32 2, %s26
        %p268 = scmp.lt.s32.totalorder %s25, 1
        %s269 = scalar_select %p268, %s25, 1
        %p270 = scmp.lt.s32.totalorder %s267, 1
        %s271 = scalar_select %p270, %s267, 1
        %s272 = smul.addr %s269, 2
        %s273 = sadd.s32 %s271, %s272
        %s274 = smul.addr %s273, 4
        %s275 = scalar_lea.vmem %s0, %s274
        %p276 = pneg %p56
        %p277 = pneg %p53
        %p278 = pneg %p77
        %p279 = pneg %p74
        %p280 = pneg %p98
        %p281 = pneg %p95
        %p282 = pneg %p119
        %p283 = pneg %p116
        %p284 = pneg %p140
        %p285 = pneg %p137
        %p286 = pneg %p161
        %p287 = pneg %p158
        %p288 = pneg %p182
        %p289 = pneg %p179
        %p290 = pneg %p210
        %p291 = pneg %p207
        %s292 = sand.u32 %s197, 1
        %s293 = scalar_lea.sflag [#allocation3], %s292
        %s294 = sand.u32 %s197, 1
        %s295 = smul.addr %s294, 8
        %s296 = scalar_lea.vmem [#allocation2], %s295
        %s297 = smul.u32 2, %s26
        %p298 = scmp.lt.s32.totalorder %s25, 1
        %s299 = scalar_select %p298, %s25, 1
        %p300 = scmp.lt.s32.totalorder %s297, 1
        %s301 = scalar_select %p300, %s297, 1
        %s302 = smul.addr %s299, 2
        %s303 = sadd.s32 %s301, %s302
        %s304 = smul.addr %s303, 4
        %s305 = scalar_lea.vmem %s0, %s304
        %s306 = smul.u32 2, %s26
        %s307 = smul.u32 2, %s26
        %v308 = vld [vmem:[%s305] sm:$0xff]
        %v309 = vld [vmem:[%s1] sm:$0xff]
        %v310 = vld [vmem:[%s2] sm:$0xff]
        %312 = vset.pattern.permute.xlu0 0
        %313 = vperm.xlu0 %312, %v310
        %v314 = vpop.permute.xlu0 %313
        %v317 = vcombine.high %v308, %v308
        %vm318 = vcmask 31744
        %v320 = vsel %vm318, %v309, 0
        %vm322 = vcmask 1043456
        %v323 = vsel %vm322, %v308, 0
        %v325 = vsel %vm322, %v317, 0
        %327 = vmatprep.subr.mxu0 %v325
        %328 = vmatpush1.msra.mxu0 %v323
        %329 = vmatprep.subr.mxu0 0.0
        %330 = vmatpush1.msra.mxu0 0.0
        %331 = vmatprep.subr.mxu0 0.0
        %332 = vmatpush1.msra.mxu0 0.0
        %333 = vmatprep.subr.mxu0 0.0
        %334 = vmatpush1.msra.mxu0 0.0
        %335 = vmatprep.subr.mxu0 0.0
        %336 = vmatpush1.msra.mxu0 0.0
        %337 = vmatprep.subr.mxu0 0.0
        %338 = vmatpush1.msra.mxu0 0.0
        %339 = vmatprep.subr.mxu0 0.0
        %340 = vmatpush1.msra.mxu0 0.0
        %341 = vmatprep.subr.mxu0 0.0
        %342 = vmatpush1.msra.mxu0 0.0
        %343 = vmatprep.subr.mxu0 0.0
        %344 = vmatpush1.msra.mxu0 0.0
        %345 = vmatprep.subr.mxu0 0.0
        %346 = vmatpush1.msra.mxu0 0.0
        %347 = vmatprep.subr.mxu0 0.0
        %348 = vmatpush1.msra.mxu0 0.0
        %349 = vmatprep.subr.mxu0 0.0
        %350 = vmatpush1.msra.mxu0 0.0
        %351 = vmatprep.subr.mxu0 0.0
        %352 = vmatpush1.msra.mxu0 0.0
        %353 = vmatprep.subr.mxu0 0.0
        %354 = vmatpush1.msra.mxu0 0.0
        %355 = vmatprep.subr.mxu0 0.0
        %356 = vmatpush1.msra.mxu0 0.0
        %357 = vmatprep.subr.mxu0 0.0
        %358 = vmatpush1.msra.mxu0 0.0
        %359 = vmatprep.subr.mxu0 0.0
        %360 = vmatpush1.msra.mxu0 0.0
        %361 = vmatprep.subr.mxu0 0.0
        %362 = vmatpush1.msra.mxu0 0.0
        %363 = vmatprep.subr.mxu0 0.0
        %364 = vmatpush1.msra.mxu0 0.0
        %365 = vmatprep.subr.mxu0 0.0
        %366 = vmatpush1.msra.mxu0 0.0
        %367 = vmatprep.subr.mxu0 0.0
        %368 = vmatpush1.msra.mxu0 0.0
        %369 = vmatprep.subr.mxu0 0.0
        %370 = vmatpush1.msra.mxu0 0.0
        %371 = vmatprep.subr.mxu0 0.0
        %372 = vmatpush1.msra.mxu0 0.0
        %373 = vmatprep.subr.mxu0 0.0
        %374 = vmatpush1.msra.mxu0 0.0
        %375 = vmatprep.subr.mxu0 0.0
        %376 = vmatpush1.msra.mxu0 0.0
        %377 = vmatprep.subr.mxu0 0.0
        %378 = vmatpush1.msra.mxu0 0.0
        %379 = vmatprep.subr.mxu0 0.0
        %380 = vmatpush1.msra.mxu0 0.0
        %381 = vmatprep.subr.mxu0 0.0
        %382 = vmatpush1.msra.mxu0 0.0
        %383 = vmatprep.subr.mxu0 0.0
        %384 = vmatpush1.msra.mxu0 0.0
        %385 = vmatprep.subr.mxu0 0.0
        %386 = vmatpush1.msra.mxu0 0.0
        %387 = vmatprep.subr.mxu0 0.0
        %388 = vmatpush1.msra.mxu0 0.0
        %389 = vmatprep.subr.mxu0 0.0
        %390 = vmatpush1.msra.mxu0 0.0
        %391 = vmatprep.mubr.f32.mxu0 0.0
        %392 = vmatmul.mubr.f32.gmra.mrb[0].mxu0 %v320
        %v393 = vpop.f32.mrb[0].mxu0
        %v394 = vadd.f32 %v314, %v393
        %v395 = vpop.f32.mrb[0].mxu0
        %v396 = vadd.f32 %v314, %v395
        %397 = vdwg.mxu0
        %vm398 = vcmp.gt.f32.partialorder %v394, 0.0
        %vm399 = vcmp.gt.f32.partialorder %v396, 0.0
        %v400 = vmul.f32 %v394, 0.2
        %v401 = vmul.f32 %v396, 0.2
        %v402 = vsel %vm398, %v394, %v400
        %v403 = vsel %vm399, %v396, %v401
        %v404 = vld [vmem:[%s3] sm:$0xff]
        %v405 = vld [vmem:[%s4] sm:$0xff]
        %407 = vset.pattern.permute.xlu0 0
        %408 = vperm.xlu0 %407, %v405
        %v409 = vpop.permute.xlu0 %408
        %vm411 = vcmask 64512
        %v413 = vsel %vm411, %v404, 0
        %415 = vmatprep.subr.mxu0 %v403
        %416 = vmatpush1.msra.mxu0 %v402
        %417 = vmatprep.subr.mxu0 0.0
        %418 = vmatpush1.msra.mxu0 0.0
        %419 = vmatprep.subr.mxu0 0.0
        %420 = vmatpush1.msra.mxu0 0.0
        %421 = vmatprep.subr.mxu0 0.0
        %422 = vmatpush1.msra.mxu0 0.0
        %423 = vmatprep.subr.mxu0 0.0
        %424 = vmatpush1.msra.mxu0 0.0
        %425 = vmatprep.subr.mxu0 0.0
        %426 = vmatpush1.msra.mxu0 0.0
        %427 = vmatprep.subr.mxu0 0.0
        %428 = vmatpush1.msra.mxu0 0.0
        %429 = vmatprep.subr.mxu0 0.0
        %430 = vmatpush1.msra.mxu0 0.0
        %431 = vmatprep.subr.mxu0 0.0
        %432 = vmatpush1.msra.mxu0 0.0
        %433 = vmatprep.subr.mxu0 0.0
        %434 = vmatpush1.msra.mxu0 0.0
        %435 = vmatprep.subr.mxu0 0.0
        %436 = vmatpush1.msra.mxu0 0.0
        %437 = vmatprep.subr.mxu0 0.0
        %438 = vmatpush1.msra.mxu0 0.0
        %439 = vmatprep.subr.mxu0 0.0
        %440 = vmatpush1.msra.mxu0 0.0
        %441 = vmatprep.subr.mxu0 0.0
        %442 = vmatpush1.msra.mxu0 0.0
        %443 = vmatprep.subr.mxu0 0.0
        %444 = vmatpush1.msra.mxu0 0.0
        %445 = vmatprep.subr.mxu0 0.0
        %446 = vmatpush1.msra.mxu0 0.0
        %447 = vmatprep.subr.mxu0 0.0
        %448 = vmatpush1.msra.mxu0 0.0
        %449 = vmatprep.subr.mxu0 0.0
        %450 = vmatpush1.msra.mxu0 0.0
        %451 = vmatprep.subr.mxu0 0.0
        %452 = vmatpush1.msra.mxu0 0.0
        %453 = vmatprep.subr.mxu0 0.0
        %454 = vmatpush1.msra.mxu0 0.0
        %455 = vmatprep.subr.mxu0 0.0
        %456 = vmatpush1.msra.mxu0 0.0
        %457 = vmatprep.subr.mxu0 0.0
        %458 = vmatpush1.msra.mxu0 0.0
        %459 = vmatprep.subr.mxu0 0.0
        %460 = vmatpush1.msra.mxu0 0.0
        %461 = vmatprep.subr.mxu0 0.0
        %462 = vmatpush1.msra.mxu0 0.0
        %463 = vmatprep.subr.mxu0 0.0
        %464 = vmatpush1.msra.mxu0 0.0
        %465 = vmatprep.subr.mxu0 0.0
        %466 = vmatpush1.msra.mxu0 0.0
        %467 = vmatprep.subr.mxu0 0.0
        %468 = vmatpush1.msra.mxu0 0.0
        %469 = vmatprep.subr.mxu0 0.0
        %470 = vmatpush1.msra.mxu0 0.0
        %471 = vmatprep.subr.mxu0 0.0
        %472 = vmatpush1.msra.mxu0 0.0
        %473 = vmatprep.subr.mxu0 0.0
        %474 = vmatpush1.msra.mxu0 0.0
        %475 = vmatprep.subr.mxu0 0.0
        %476 = vmatpush1.msra.mxu0 0.0
        %477 = vmatprep.subr.mxu0 0.0
        %478 = vmatpush1.msra.mxu0 0.0
        %479 = vmatprep.mubr.f32.mxu0 0.0
        %480 = vmatmul.mubr.f32.gmra.mrb[0].mxu0 %v413
        %v481 = vpop.f32.mrb[0].mxu0
        %v482 = vadd.f32 %v409, %v481
        %v483 = vpop.f32.mrb[0].mxu0
        %v484 = vadd.f32 %v409, %v483
        %485 = vdwg.mxu0
        %vm486 = vcmp.gt.f32.partialorder %v482, 0.0
        %vm487 = vcmp.gt.f32.partialorder %v484, 0.0
        %v488 = vmul.f32 %v482, 0.2
        %v489 = vmul.f32 %v484, 0.2
        %v490 = vsel %vm486, %v482, %v488
        %v491 = vsel %vm487, %v484, %v489
        %v492 = vld [vmem:[%s5] sm:$0xf]
        %v493 = vld [vmem:[%s6] sm:$0xf]
        %495 = vset.pattern.permute.xlu0 0
        %496 = vperm.xlu0 %495, %v493
        %v497 = vpop.permute.xlu0 %496
        %v500 = vsel %vm411, %v492, 0
        %502 = vmatprep.subr.mxu0 %v491
        %503 = vmatpush1.msra.mxu0 %v490
        %504 = vmatprep.subr.mxu0 0.0
        %505 = vmatpush1.msra.mxu0 0.0
        %506 = vmatprep.subr.mxu0 0.0
        %507 = vmatpush1.msra.mxu0 0.0
        %508 = vmatprep.subr.mxu0 0.0
        %509 = vmatpush1.msra.mxu0 0.0
        %510 = vmatprep.subr.mxu0 0.0
        %511 = vmatpush1.msra.mxu0 0.0
        %512 = vmatprep.subr.mxu0 0.0
        %513 = vmatpush1.msra.mxu0 0.0
        %514 = vmatprep.subr.mxu0 0.0
        %515 = vmatpush1.msra.mxu0 0.0
        %516 = vmatprep.subr.mxu0 0.0
        %517 = vmatpush1.msra.mxu0 0.0
        %518 = vmatprep.subr.mxu0 0.0
        %519 = vmatpush1.msra.mxu0 0.0
        %520 = vmatprep.subr.mxu0 0.0
        %521 = vmatpush1.msra.mxu0 0.0
        %522 = vmatprep.subr.mxu0 0.0
        %523 = vmatpush1.msra.mxu0 0.0
        %524 = vmatprep.subr.mxu0 0.0
        %525 = vmatpush1.msra.mxu0 0.0
        %526 = vmatprep.subr.mxu0 0.0
        %527 = vmatpush1.msra.mxu0 0.0
        %528 = vmatprep.subr.mxu0 0.0
        %529 = vmatpush1.msra.mxu0 0.0
        %530 = vmatprep.subr.mxu0 0.0
        %531 = vmatpush1.msra.mxu0 0.0
        %532 = vmatprep.subr.mxu0 0.0
        %533 = vmatpush1.msra.mxu0 0.0
        %534 = vmatprep.subr.mxu0 0.0
        %535 = vmatpush1.msra.mxu0 0.0
        %536 = vmatprep.subr.mxu0 0.0
        %537 = vmatpush1.msra.mxu0 0.0
        %538 = vmatprep.subr.mxu0 0.0
        %539 = vmatpush1.msra.mxu0 0.0
        %540 = vmatprep.subr.mxu0 0.0
        %541 = vmatpush1.msra.mxu0 0.0
        %542 = vmatprep.subr.mxu0 0.0
        %543 = vmatpush1.msra.mxu0 0.0
        %544 = vmatprep.subr.mxu0 0.0
        %545 = vmatpush1.msra.mxu0 0.0
        %546 = vmatprep.subr.mxu0 0.0
        %547 = vmatpush1.msra.mxu0 0.0
        %548 = vmatprep.subr.mxu0 0.0
        %549 = vmatpush1.msra.mxu0 0.0
        %550 = vmatprep.subr.mxu0 0.0
        %551 = vmatpush1.msra.mxu0 0.0
        %552 = vmatprep.subr.mxu0 0.0
        %553 = vmatpush1.msra.mxu0 0.0
        %554 = vmatprep.subr.mxu0 0.0
        %555 = vmatpush1.msra.mxu0 0.0
        %556 = vmatprep.subr.mxu0 0.0
        %557 = vmatpush1.msra.mxu0 0.0
        %558 = vmatprep.subr.mxu0 0.0
        %559 = vmatpush1.msra.mxu0 0.0
        %560 = vmatprep.subr.mxu0 0.0
        %561 = vmatpush1.msra.mxu0 0.0
        %562 = vmatprep.subr.mxu0 0.0
        %563 = vmatpush1.msra.mxu0 0.0
        %564 = vmatprep.subr.mxu0 0.0
        %565 = vmatpush1.msra.mxu0 0.0
        %566 = vmatprep.mubr.f32.mxu0 0.0
        %567 = vmatmul.mubr.f32.gmra.mrb[0].mxu0 %v500
        %v568 = vpop.f32.mrb[0].mxu0
        %v569 = vadd.f32 %v497, %v568
        %v570 = vpop.f32.mrb[0].mxu0
        %v571 = vadd.f32 %v497, %v570
        %572 = vdwg.mxu0
        %v574 = vadd.f32 %v569, %v308
        %v575 = vadd.f32 %v571, %v317
        %vm576 = vcmp.gt.f32.partialorder %v574, 0.0
        %vm577 = vcmp.gt.f32.partialorder %v575, 0.0
        %v578 = vmul.f32 %v574, 0.2
        %v579 = vmul.f32 %v575, 0.2
        %v580 = vsel %vm576, %v574, %v578
        %v581 = vsel %vm577, %v575, %v579
        %v584 = vcombine.low %v580, %v581
        %586 = vst [vmem:[%s296] sm:$0xff] %v584
        %s587 = sand.u32 %s197, 1
        %s588 = scalar_lea.sflag [#allocation3], %s587
        %s589 = sand.u32 %s197, 1
        %s590 = smul.addr %s589, 8
        %s591 = scalar_lea.vmem [#allocation2], %s590
        // Predicated region
        $region49: #{tpu_custom_call.1} parent=47 // pred_check
          %p592 = pneg %p207
        $region50: #{tpu_custom_call.1} parent=47 // pred_check_branch
          %594 = sbr.rel (%p592) target = $region52
        $region51: #{tpu_custom_call.1} parent=47 // pred_region
          %s595 = smul.u32 2, %s26
          %s597 = ssub.s32 128, 128
          %598 = vsyncadd %s588, %s597
          %s599 = smul.addr %s25, 2
          %s600 = sadd.s32 %s595, %s599
          %s601 = smul.addr %s600, 64
          %s602 = scalar_lea.hbm %s7, %s601
          %s604 = sshll.u32 %s591, 4
          %s605 = int_to_ptr.vmem [resolvable:$true] %s604
          %607 = dma.vmem_to_hbm [thread:$0]  %s605, 128, %s602, %s588
        $region52: #{tpu_custom_call.1} parent=47 // pred_fallthru
          _
      $region48: #{tpu_custom_call.1} parent=5 // pred_fallthru
        _
      %p608 = scmp.le.s32.totalorder 2, %s16
      // Predicated region
      $region53: #{tpu_custom_call.1} parent=5 // pred_check
        %p609 = pneg %p608
      $region54: #{tpu_custom_call.1} parent=5 // pred_check_branch
        %611 = sbr.rel (%p609) target = $region56
      $region55: #{tpu_custom_call.1} parent=5 // pred_region
        %s612 = ssub.s32 %s16, 2
        // Predicated region
        $region57: #{tpu_custom_call.1} parent=55 // pred_check
          %p613 = pneg %p213
        $region58: #{tpu_custom_call.1} parent=55 // pred_check_branch
          %615 = sbr.rel (%p613) target = $region60
        $region59: #{tpu_custom_call.1} parent=55 // pred_region
          %s616 = sand.u32 %s198, 1
          %s617 = scalar_lea.sflag [#allocation3], %s616
          %s618 = sand.u32 %s198, 1
          %s619 = smul.addr %s618, 8
          %s620 = scalar_lea.vmem [#allocation2], %s619
          %621 = dma.done %s617, 128
        $region60: #{tpu_custom_call.1} parent=55 // pred_fallthru
          _
      $region56: #{tpu_custom_call.1} parent=5 // pred_fallthru
        _
    $region6: #{tpu_custom_call.1} parent=1 // loop_footer
      %s20 = sadd.s32 1, %s16
    $region7: #{tpu_custom_call.1} parent=1 // loop_footer_branch
      %15 = sbr.rel target = $region3
    $region8: #{tpu_custom_call.1} parent=1 // loop_exit
      _
    %622 = vsyncpa [#allocation3], 1
    %s623 = scalar_lea.sflag [#allocation3], 1
    %624 = vsyncpa %s623, 1

</llo_original>
